<compile_context>
chip_gen: v7x
topology: tpu7x:2x2x1
jax: 0.10.0
libtpu: 0.0.40
codegen_flags: <defaults>
</compile_context>

<pallas_src>
import math

import jax
import jax.numpy as jnp
from jax.experimental import pallas as pl
from jax.experimental.pallas import tpu as pltpu


# ----------------------------------------------------------------------------
# Exact (erf-based) GELU, built only from ops guaranteed to lower in Mosaic
# (exp / mul / add / where / div).  Abramowitz & Stegun 7.1.26 erf
# approximation, |abs error| <= 1.5e-7 -- numerically indistinguishable from
# the exact erf GELU at fp32 / bf16-matmul precision (NOT the tanh approx).
# ----------------------------------------------------------------------------
_ERF_P = 0.3275911
_ERF_A1 = 0.254829592
_ERF_A2 = -0.284496736
_ERF_A3 = 1.421413741
_ERF_A4 = -1.453152027
_ERF_A5 = 1.061405429
_INV_SQRT2 = 0.7071067811865476


def _erf_f32(x):
    s = jnp.where(x >= 0.0, 1.0, -1.0).astype(jnp.float32)
    a = jnp.abs(x)
    t = 1.0 / (1.0 + _ERF_P * a)
    poly = t * (_ERF_A1 + t * (_ERF_A2 + t * (_ERF_A3 + t * (_ERF_A4 + t * _ERF_A5))))
    return s * (1.0 - poly * jnp.exp(-a * a))


def _gelu_exact_f32(x):
    return 0.5 * x * (1.0 + _erf_f32(x * _INV_SQRT2))


# ----------------------------------------------------------------------------
# Kernel body: one token tile, all three matmuls fused, intermediates in VMEM.
# ----------------------------------------------------------------------------
def _ffn_kernel(x_ref, wg_ref, wi_ref, wo_ref, o_ref):
    x = x_ref[...]                                     # [tile, p*d_in]  (bf16)
    g = jnp.dot(x, wg_ref[...], preferred_element_type=jnp.float32)  # f32 acc
    h = jnp.dot(x, wi_ref[...], preferred_element_type=jnp.float32)  # f32 acc
    g = _gelu_exact_f32(g)                             # f32 elementwise (VPU/EUP)
    z = (g * h).astype(wo_ref.dtype)                   # back to bf16 for the MXU
    y = jnp.dot(z, wo_ref[...], preferred_element_type=jnp.float32)
    o_ref[...] = y.astype(o_ref.dtype)


def _round_up(n, m):
    return ((n + m - 1) // m) * m


# ----------------------------------------------------------------------------
# Wrapper: token packing, block-diagonal weights, padding, pallas_call.
# ----------------------------------------------------------------------------
def ffn_pallas(x, wg, wi, wo, *, block_rows=512, compute_dtype=jnp.bfloat16):
    """Gated FFN forward.

    x  : [..., d_in]           activations
    wg : [d_ff, d_in]          gate.weight  (PyTorch Linear layout [out, in])
    wi : [d_ff, d_in]          wi.weight
    wo : [d_out, d_ff]         wo.weight
    returns [..., d_out]
    """
    assert block_rows % 8 == 0, "block_rows must be a multiple of 8"
    orig_shape = x.shape
    orig_dtype = x.dtype
    d_in = x.shape[-1]
    d_ff = wg.shape[0]
    d_out = wo.shape[0]
    assert wg.shape == (d_ff, d_in) and wi.shape == (d_ff, d_in)
    assert wo.shape == (d_out, d_ff)

    # Lane-packing factor: fold p consecutive tokens into one 128-lane row.
    p = (128 // d_in) if (d_in <= 128 and 128 % d_in == 0) else 1

    x2 = x.reshape(-1, d_in)
    n_tok = x2.shape[0]
    n_rows = -(-n_tok // p)                       # ceil(n_tok / p) packed rows
    tile_rows = min(block_rows, _round_up(n_rows, 8))
    n_rows_pad = _round_up(n_rows, tile_rows)
    n_tok_pad = n_rows_pad * p
    if n_tok_pad != n_tok:
        x2 = jnp.pad(x2, ((0, n_tok_pad - n_tok), (0, 0)))
    xr = x2.reshape(n_rows_pad, p * d_in).astype(compute_dtype)

    # Block-diagonal (kron) transposed weights -> every matmul is lane-dense.
    eye = jnp.eye(p, dtype=compute_dtype)
    wg_bd = jnp.kron(eye, wg.T.astype(compute_dtype))   # [p*d_in, p*d_ff]
    wi_bd = jnp.kron(eye, wi.T.astype(compute_dtype))   # [p*d_in, p*d_ff]
    wo_bd = jnp.kron(eye, wo.T.astype(compute_dtype))   # [p*d_ff, p*d_out]

    grid = (n_rows_pad // tile_rows,)

    out = pl.pallas_call(
        _ffn_kernel,
        out_shape=jax.ShapeDtypeStruct((n_rows_pad, p * d_out), jnp.float32),
        grid_spec=pltpu.PrefetchScalarGridSpec(
            num_scalar_prefetch=0,
            grid=grid,
            in_specs=[
                # streamed activations: new block every grid step
                pl.BlockSpec((tile_rows, p * d_in), lambda i: (i, 0)),
                # VMEM-resident weights: constant block index -> DMA'd once
                pl.BlockSpec((p * d_in, p * d_ff), lambda i: (0, 0)),
                pl.BlockSpec((p * d_in, p * d_ff), lambda i: (0, 0)),
                pl.BlockSpec((p * d_ff, p * d_out), lambda i: (0, 0)),
            ],
            out_specs=pl.BlockSpec((tile_rows, p * d_out), lambda i: (i, 0)),
        ),
        compiler_params=pltpu.CompilerParams(
            dimension_semantics=("parallel",),       # shard token loop on v7x TCs
            vmem_limit_bytes=32 * 1024 * 1024,
        ),
    )(xr, wg_bd, wi_bd, wo_bd)

    y = out.reshape(n_tok_pad, d_out)[:n_tok].astype(orig_dtype)
    return y.reshape(*orig_shape[:-1], d_out)


# ----------------------------------------------------------------------------
# Pure-JAX fp32 reference (matches the PyTorch forward, eval mode).
# ----------------------------------------------------------------------------
def ffn_reference(x, wg, wi, wo):
    xf = x.astype(jnp.float32)
    gate = jax.nn.gelu(xf @ wg.T.astype(jnp.float32), approximate=False)
    h = xf @ wi.T.astype(jnp.float32)
    y = (gate * h) @ wo.T.astype(jnp.float32)
    return y.astype(x.dtype)


if __name__ == "__main__":
    key = jax.random.PRNGKey(0)
    k1, k2, k3, k4, k5 = jax.random.split(key, 5)

    # ITERConfig-ish small shapes: d_model = 32, d_ff = 64, in/out channels = d_model.
    d_model, d_ff = 32, 64
    batch, seq = 2, 8

    x = jax.random.normal(k1, (batch, seq, d_model), dtype=jnp.float32)
    # PyTorch Linear(bias=False) weight layout: [out_features, in_features]
    wg = jax.random.normal(k2, (d_ff, d_model), jnp.float32) * (1.0 / math.sqrt(d_model))
    wi = jax.random.normal(k3, (d_ff, d_model), jnp.float32) * (1.0 / math.sqrt(d_model))
    wo = jax.random.normal(k4, (d_model, d_ff), jnp.float32) * (1.0 / math.sqrt(d_ff))

    # --- main check (single grid step) ---
    y = jax.block_until_ready(ffn_pallas(x, wg, wi, wo))
    y_ref = ffn_reference(x, wg, wi, wo)
    assert y.shape == y_ref.shape == (batch, seq, d_model)
    max_err = float(jnp.max(jnp.abs(y - y_ref)))
    assert jnp.allclose(y, y_ref, rtol=2e-2, atol=2e-2), f"max abs err {max_err}"

    # --- second check: ragged token count + multi-step grid (exercises padding
    #     and the parallel token axis / index_maps) ---
    x2 = jax.random.normal(k5, (3, 100, d_model), dtype=jnp.float32)
    y2 = jax.block_until_ready(ffn_pallas(x2, wg, wi, wo, block_rows=16))
    y2_ref = ffn_reference(x2, wg, wi, wo)
    max_err2 = float(jnp.max(jnp.abs(y2 - y2_ref)))
    assert jnp.allclose(y2, y2_ref, rtol=2e-2, atol=2e-2), f"max abs err {max_err2}"

    print("KERNEL_OK")
</pallas_src>

<mosaic_0001>
module attributes {stable_mosaic.version = 11 : i64} {
  func.func @_ffn_kernel(%arg0: i32, %arg1: memref<8x128xbf16, #tpu.memory_space<vmem>>, %arg2: memref<128x256xbf16, #tpu.memory_space<vmem>>, %arg3: memref<128x256xbf16, #tpu.memory_space<vmem>>, %arg4: memref<256x128xbf16, #tpu.memory_space<vmem>>, %arg5: memref<8x128xf32, #tpu.memory_space<vmem>>) attributes {dimension_semantics = [#tpu.dimension_semantics<parallel>], iteration_bounds = array<i64: 1>, scalar_prefetch = 0 : i64, scratch_operands = 0 : i64, tpu.core_type = #tpu.core_type<tc>, window_params = [{transform_indices = @transform_0, window_bounds = array<i64: 8, 128>}, {pipeline_mode = #tpu.pipeline_mode<synchronous>, transform_indices = @transform_1, window_bounds = array<i64: 128, 256>}, {pipeline_mode = #tpu.pipeline_mode<synchronous>, transform_indices = @transform_2, window_bounds = array<i64: 128, 256>}, {pipeline_mode = #tpu.pipeline_mode<synchronous>, transform_indices = @transform_3, window_bounds = array<i64: 256, 128>}, {transform_indices = @transform_4, window_bounds = array<i64: 8, 128>}]} {
    %c0 = arith.constant 0 : index
    %c0_0 = arith.constant 0 : index
    %0 = vector.load %arg1[%c0, %c0_0] : memref<8x128xbf16, #tpu.memory_space<vmem>>, vector<8x128xbf16>
    %c0_1 = arith.constant 0 : index
    %c0_2 = arith.constant 0 : index
    %1 = vector.load %arg2[%c0_1, %c0_2] : memref<128x256xbf16, #tpu.memory_space<vmem>>, vector<128x256xbf16>
    %cst = arith.constant dense<0.000000e+00> : vector<8x256xf32>
    %2 = tpu.matmul %0, %1, %cst {dimension_numbers = #tpu.dot_dimension_numbers<[1], [0], [0], [1], [0, 0, 1, 1], [], []>} : vector<8x128xbf16>, vector<128x256xbf16>, vector<8x256xf32> -> vector<8x256xf32>
    %c0_3 = arith.constant 0 : index
    %c0_4 = arith.constant 0 : index
    %3 = vector.load %arg3[%c0_3, %c0_4] : memref<128x256xbf16, #tpu.memory_space<vmem>>, vector<128x256xbf16>
    %cst_5 = arith.constant dense<0.000000e+00> : vector<8x256xf32>
    %4 = tpu.matmul %0, %3, %cst_5 {dimension_numbers = #tpu.dot_dimension_numbers<[1], [0], [0], [1], [0, 0, 1, 1], [], []>} : vector<8x128xbf16>, vector<128x256xbf16>, vector<8x256xf32> -> vector<8x256xf32>
    %cst_6 = arith.constant 5.000000e-01 : f32
    %5 = vector.broadcast %cst_6 : f32 to vector<8x256xf32>
    %6 = arith.mulf %5, %2 : vector<8x256xf32>
    %cst_7 = arith.constant 0.707106769 : f32
    %7 = vector.broadcast %cst_7 : f32 to vector<8x256xf32>
    %8 = arith.mulf %2, %7 : vector<8x256xf32>
    %cst_8 = arith.constant 0.000000e+00 : f32
    %9 = vector.broadcast %cst_8 : f32 to vector<8x256xf32>
    %10 = arith.cmpf oge, %8, %9 : vector<8x256xf32>
    %cst_9 = arith.constant 1.000000e+00 : f32
    %cst_10 = arith.constant -1.000000e+00 : f32
    %11 = vector.broadcast %cst_9 : f32 to vector<8x256xf32>
    %12 = vector.broadcast %cst_10 : f32 to vector<8x256xf32>
    %13 = arith.select %10, %11, %12 : vector<8x256xi1>, vector<8x256xf32>
    %14 = math.absf %8 : vector<8x256xf32>
    %cst_11 = arith.constant 0.327591091 : f32
    %15 = vector.broadcast %cst_11 : f32 to vector<8x256xf32>
    %16 = arith.mulf %15, %14 : vector<8x256xf32>
    %cst_12 = arith.constant 1.000000e+00 : f32
    %17 = vector.broadcast %cst_12 : f32 to vector<8x256xf32>
    %18 = arith.addf %17, %16 : vector<8x256xf32>
    %cst_13 = arith.constant 1.000000e+00 : f32
    %19 = vector.broadcast %cst_13 : f32 to vector<8x256xf32>
    %20 = arith.divf %19, %18 : vector<8x256xf32>
    %cst_14 = arith.constant 1.06140542 : f32
    %21 = vector.broadcast %cst_14 : f32 to vector<8x256xf32>
    %22 = arith.mulf %20, %21 : vector<8x256xf32>
    %cst_15 = arith.constant -1.45315206 : f32
    %23 = vector.broadcast %cst_15 : f32 to vector<8x256xf32>
    %24 = arith.addf %23, %22 : vector<8x256xf32>
    %25 = arith.mulf %20, %24 : vector<8x256xf32>
    %cst_16 = arith.constant 1.42141378 : f32
    %26 = vector.broadcast %cst_16 : f32 to vector<8x256xf32>
    %27 = arith.addf %26, %25 : vector<8x256xf32>
    %28 = arith.mulf %20, %27 : vector<8x256xf32>
    %cst_17 = arith.constant -0.284496725 : f32
    %29 = vector.broadcast %cst_17 : f32 to vector<8x256xf32>
    %30 = arith.addf %29, %28 : vector<8x256xf32>
    %31 = arith.mulf %20, %30 : vector<8x256xf32>
    %cst_18 = arith.constant 0.254829586 : f32
    %32 = vector.broadcast %cst_18 : f32 to vector<8x256xf32>
    %33 = arith.addf %32, %31 : vector<8x256xf32>
    %34 = arith.mulf %20, %33 : vector<8x256xf32>
    %cst_19 = arith.constant 0.000000e+00 : f32
    %35 = vector.broadcast %cst_19 : f32 to vector<8x256xf32>
    %36 = arith.subf %35, %14 : vector<8x256xf32>
    %37 = arith.mulf %36, %14 : vector<8x256xf32>
    %38 = math.exp %37 : vector<8x256xf32>
    %39 = arith.mulf %34, %38 : vector<8x256xf32>
    %cst_20 = arith.constant 1.000000e+00 : f32
    %40 = vector.broadcast %cst_20 : f32 to vector<8x256xf32>
    %41 = arith.subf %40, %39 : vector<8x256xf32>
    %42 = arith.mulf %13, %41 : vector<8x256xf32>
    %cst_21 = arith.constant 1.000000e+00 : f32
    %43 = vector.broadcast %cst_21 : f32 to vector<8x256xf32>
    %44 = arith.addf %43, %42 : vector<8x256xf32>
    %45 = arith.mulf %6, %44 : vector<8x256xf32>
    %46 = arith.mulf %45, %4 : vector<8x256xf32>
    %47 = arith.truncf %46 : vector<8x256xf32> to vector<8x256xbf16>
    %c0_22 = arith.constant 0 : index
    %c0_23 = arith.constant 0 : index
    %48 = vector.load %arg4[%c0_22, %c0_23] : memref<256x128xbf16, #tpu.memory_space<vmem>>, vector<256x128xbf16>
    %cst_24 = arith.constant dense<0.000000e+00> : vector<8x128xf32>
    %49 = tpu.matmul %47, %48, %cst_24 {dimension_numbers = #tpu.dot_dimension_numbers<[1], [0], [0], [1], [0, 0, 1, 1], [], []>} : vector<8x256xbf16>, vector<256x128xbf16>, vector<8x128xf32> -> vector<8x128xf32>
    %c0_25 = arith.constant 0 : index
    %c0_26 = arith.constant 0 : index
    %50 = vector.load %arg5[%c0_25, %c0_26] : memref<8x128xf32, #tpu.memory_space<vmem>>, vector<8x128xf32>
    tpu.vector_store %arg5[%c0_25, %c0_26], %49 {strides = array<i32>} : memref<8x128xf32, #tpu.memory_space<vmem>>, vector<8x128xf32>,
    return
  }
  func.func @transform_0(%arg0: i32) -> (i32, i32) {
    %c0_i32 = arith.constant 0 : i32
    %c0_i32_0 = arith.constant 0 : i32
    return %arg0, %c0_i32 : i32, i32
  }
  func.func @transform_1(%arg0: i32) -> (i32, i32) {
    %c0_i32 = arith.constant 0 : i32
    %c0_i32_0 = arith.constant 0 : i32
    %c0_i32_1 = arith.constant 0 : i32
    return %c0_i32, %c0_i32_0 : i32, i32
  }
  func.func @transform_2(%arg0: i32) -> (i32, i32) {
    %c0_i32 = arith.constant 0 : i32
    %c0_i32_0 = arith.constant 0 : i32
    %c0_i32_1 = arith.constant 0 : i32
    return %c0_i32, %c0_i32_0 : i32, i32
  }
  func.func @transform_3(%arg0: i32) -> (i32, i32) {
    %c0_i32 = arith.constant 0 : i32
    %c0_i32_0 = arith.constant 0 : i32
    %c0_i32_1 = arith.constant 0 : i32
    return %c0_i32, %c0_i32_0 : i32, i32
  }
  func.func @transform_4(%arg0: i32) -> (i32, i32) {
    %c0_i32 = arith.constant 0 : i32
    %c0_i32_0 = arith.constant 0 : i32
    return %arg0, %c0_i32 : i32, i32
  }
}

</mosaic_0001>

<llo_original>
// kernel: tpu_custom_call.1
$region0: #{tpu_custom_call.1}
  #allocation0 [shape = 'u32[]', space=smem, size = 0x4, offset = 0x4, fixed_abs, tag = 'smem constant byte address 0x4 - core index']
  #allocation1 [shape = 'u32[144,128]{1,0:T(1,128)}', space=vmem, size = 0x12000, scoped, tag = 'internal scratch']
  %s0 = inlined_call_operand.hbm [shape: bf16[8,128], index: 0, kind: input, shape index: {}]
  %s1 = inlined_call_operand.hbm [shape: bf16[128,256], index: 1, kind: input, shape index: {}]
  %s2 = inlined_call_operand.hbm [shape: bf16[128,256], index: 2, kind: input, shape index: {}]
  %s3 = inlined_call_operand.hbm [shape: bf16[256,128], index: 3, kind: input, shape index: {}]
  %s4 = inlined_call_operand.hbm [shape: f32[8,128], index: 4, kind: output, shape index: {}]
  %s5 = sld [smem:[#allocation0]]
  $region42: #{tpu_custom_call.1} parent=0
    _
  %s7 = ssub.s32 1, %s5
  %s8 = scalar_select 0, %s7, %s5
  $region1: #{tpu_custom_call.1} parent=0
    #allocation2 [shape = 'u8[2048]{0}', space=vmem, size = 0x800, scoped, tag = 'input window, operand 0, single buffered']
    #allocation3 [shape = 's32[1]{0}', space=sflag, size = 0x4, scoped, tag = 'scoped memory for tpu_custom_call.1']
    #allocation4 [shape = 's32[1]{0}', space=sflag, size = 0x4, scoped, tag = 'scoped memory for tpu_custom_call.1']
    #allocation5 [shape = 'u8[65536]{0}', space=vmem, size = 0x10000, scoped, tag = 'input window, operand 1, single buffered']
    #allocation6 [shape = 's32[1]{0}', space=sflag, size = 0x4, scoped, tag = 'scoped memory for tpu_custom_call.1']
    #allocation7 [shape = 'u8[65536]{0}', space=vmem, size = 0x10000, scoped, tag = 'input window, operand 2, single buffered']
    #allocation8 [shape = 'u8[65536]{0}', space=vmem, size = 0x10000, scoped, tag = 'input window, operand 3, single buffered']
    #allocation9 [shape = 's32[1]{0}', space=sflag, size = 0x4, scoped, tag = 'scoped memory for tpu_custom_call.1']
    #allocation10 [shape = 'u8[4096]{0}', space=vmem, size = 0x1000, scoped, tag = 'output window, operand 0, single buffered']
    %9 = vsyncpa [#allocation3], 0
    %10 = vsyncpa [#allocation6], 0
    %11 = vsyncpa [#allocation9], 0
    %12 = vsyncpa [#allocation4], 0
    // Predicated region
    $region2: #{tpu_custom_call.1} parent=1 // pred_check
      _
    $region3: #{tpu_custom_call.1} parent=1 // pred_check_branch
      %14 = sbr.rel (0) target = $region5
    $region4: #{tpu_custom_call.1} parent=1 // pred_region
      %s16 = ssub.s32 64, 64
      %17 = vsyncadd [#allocation3], %s16
      %s19 = sshll.u32 [#allocation2], 4
      %s20 = int_to_ptr.vmem [resolvable:$true] %s19
      %22 = dma.hbm_to_vmem [thread:$0]  %s0, 64, %s20, [#allocation3]
    $region5: #{tpu_custom_call.1} parent=1 // pred_fallthru
      _
    // Predicated region
    $region6: #{tpu_custom_call.1} parent=1 // pred_check
      _
    $region7: #{tpu_custom_call.1} parent=1 // pred_check_branch
      %24 = sbr.rel (0) target = $region9
    $region8: #{tpu_custom_call.1} parent=1 // pred_region
      %s26 = ssub.s32 2048, 2048
      %27 = vsyncadd [#allocation6], %s26
      %s28 = sshll.u32 [#allocation5], 4
      %s29 = int_to_ptr.vmem [resolvable:$true] %s28
      %34 = dma.hbm_to_vmem [thread:$0]  %s1, 2048, %s29, [#allocation6], 128, 128, 8
    $region9: #{tpu_custom_call.1} parent=1 // pred_fallthru
      _
    // Predicated region
    $region10: #{tpu_custom_call.1} parent=1 // pred_check
      _
    $region11: #{tpu_custom_call.1} parent=1 // pred_check_branch
      %36 = sbr.rel (0) target = $region13
    $region12: #{tpu_custom_call.1} parent=1 // pred_region
      %s38 = ssub.s32 2048, 2048
      %39 = vsyncadd [#allocation6], %s38
      %s40 = sshll.u32 [#allocation7], 4
      %s41 = int_to_ptr.vmem [resolvable:$true] %s40
      %46 = dma.hbm_to_vmem [thread:$0]  %s2, 2048, %s41, [#allocation6], 128, 128, 8
    $region13: #{tpu_custom_call.1} parent=1 // pred_fallthru
      _
    // Predicated region
    $region14: #{tpu_custom_call.1} parent=1 // pred_check
      _
    $region15: #{tpu_custom_call.1} parent=1 // pred_check_branch
      %48 = sbr.rel (0) target = $region17
    $region16: #{tpu_custom_call.1} parent=1 // pred_region
      %s50 = ssub.s32 2048, 2048
      %51 = vsyncadd [#allocation9], %s50
      %s52 = sshll.u32 [#allocation8], 4
      %s53 = int_to_ptr.vmem [resolvable:$true] %s52
      %58 = dma.hbm_to_vmem [thread:$0]  %s3, 2048, %s53, [#allocation9], 64, 64, 4
    $region17: #{tpu_custom_call.1} parent=1 // pred_fallthru
      _
    // Predicated region
    $region18: #{tpu_custom_call.1} parent=1 // pred_check
      _
    $region19: #{tpu_custom_call.1} parent=1 // pred_check_branch
      %60 = sbr.rel (0) target = $region21
    $region20: #{tpu_custom_call.1} parent=1 // pred_region
      %61 = dma.done [#allocation3], 64
    $region21: #{tpu_custom_call.1} parent=1 // pred_fallthru
      _
    // Predicated region
    $region22: #{tpu_custom_call.1} parent=1 // pred_check
      _
    $region23: #{tpu_custom_call.1} parent=1 // pred_check_branch
      %63 = sbr.rel (0) target = $region25
    $region24: #{tpu_custom_call.1} parent=1 // pred_region
      %64 = dma.done [#allocation6], 2048
    $region25: #{tpu_custom_call.1} parent=1 // pred_fallthru
      _
    // Predicated region
    $region26: #{tpu_custom_call.1} parent=1 // pred_check
      _
    $region27: #{tpu_custom_call.1} parent=1 // pred_check_branch
      %66 = sbr.rel (0) target = $region29
    $region28: #{tpu_custom_call.1} parent=1 // pred_region
      %67 = dma.done [#allocation6], 2048
    $region29: #{tpu_custom_call.1} parent=1 // pred_fallthru
      _
    // Predicated region
    $region30: #{tpu_custom_call.1} parent=1 // pred_check
      _
    $region31: #{tpu_custom_call.1} parent=1 // pred_check_branch
      %69 = sbr.rel (0) target = $region33
    $region32: #{tpu_custom_call.1} parent=1 // pred_region
      %70 = dma.done [#allocation9], 2048
    $region33: #{tpu_custom_call.1} parent=1 // pred_fallthru
      _
    %v72 = vld [vmem:[#allocation2] sm:$0xf]
    %v73 = vld [vmem:[#allocation5] sm:$0xff]
    %v74 = vld [vmem:[#allocation5 + $0x8] sm:$0xff]
    %v75 = vld [vmem:[#allocation5 + $0x10] sm:$0xff]
    %v76 = vld [vmem:[#allocation5 + $0x18] sm:$0xff]
    %v77 = vld [vmem:[#allocation5 + $0x20] sm:$0xff]
    %v78 = vld [vmem:[#allocation5 + $0x28] sm:$0xff]
    %v79 = vld [vmem:[#allocation5 + $0x30] sm:$0xff]
    %v80 = vld [vmem:[#allocation5 + $0x38] sm:$0xff]
    %v81 = vld [vmem:[#allocation5 + $0x40] sm:$0xff]
    %v82 = vld [vmem:[#allocation5 + $0x48] sm:$0xff]
    %v83 = vld [vmem:[#allocation5 + $0x50] sm:$0xff]
    %v84 = vld [vmem:[#allocation5 + $0x58] sm:$0xff]
    %v85 = vld [vmem:[#allocation5 + $0x60] sm:$0xff]
    %v86 = vld [vmem:[#allocation5 + $0x68] sm:$0xff]
    %v87 = vld [vmem:[#allocation5 + $0x70] sm:$0xff]
    %v88 = vld [vmem:[#allocation5 + $0x78] sm:$0xff]
    %v105 = vunpack.c.l.b16 %v73
    %v106 = vunpack.c.h.b16 %v73
    %v107 = vunpack.c.l.b16 %v74
    %v108 = vunpack.c.h.b16 %v74
    %v109 = vunpack.c.l.b16 %v75
    %v110 = vunpack.c.h.b16 %v75
    %v111 = vunpack.c.l.b16 %v76
    %v112 = vunpack.c.h.b16 %v76
    %v113 = vunpack.c.l.b16 %v77
    %v114 = vunpack.c.h.b16 %v77
    %v115 = vunpack.c.l.b16 %v78
    %v116 = vunpack.c.h.b16 %v78
    %v117 = vunpack.c.l.b16 %v79
    %v118 = vunpack.c.h.b16 %v79
    %v119 = vunpack.c.l.b16 %v80
    %v120 = vunpack.c.h.b16 %v80
    %v121 = vunpack.c.l.b16 %v81
    %v122 = vunpack.c.h.b16 %v81
    %v123 = vunpack.c.l.b16 %v82
    %v124 = vunpack.c.h.b16 %v82
    %v125 = vunpack.c.l.b16 %v83
    %v126 = vunpack.c.h.b16 %v83
    %v127 = vunpack.c.l.b16 %v84
    %v128 = vunpack.c.h.b16 %v84
    %v129 = vunpack.c.l.b16 %v85
    %v130 = vunpack.c.h.b16 %v85
    %v131 = vunpack.c.l.b16 %v86
    %v132 = vunpack.c.h.b16 %v86
    %v133 = vunpack.c.l.b16 %v87
    %v134 = vunpack.c.h.b16 %v87
    %v135 = vunpack.c.l.b16 %v88
    %v136 = vunpack.c.h.b16 %v88
    %v137 = vpack.c.b16 %v107, %v105
    %v138 = vpack.c.b16 %v108, %v106
    %v139 = vpack.c.b16 %v111, %v109
    %v140 = vpack.c.b16 %v112, %v110
    %v141 = vpack.c.b16 %v115, %v113
    %v142 = vpack.c.b16 %v116, %v114
    %v143 = vpack.c.b16 %v119, %v117
    %v144 = vpack.c.b16 %v120, %v118
    %v145 = vpack.c.b16 %v123, %v121
    %v146 = vpack.c.b16 %v124, %v122
    %v147 = vpack.c.b16 %v127, %v125
    %v148 = vpack.c.b16 %v128, %v126
    %v149 = vpack.c.b16 %v131, %v129
    %v150 = vpack.c.b16 %v132, %v130
    %v151 = vpack.c.b16 %v135, %v133
    %v152 = vpack.c.b16 %v136, %v134
    %169 = vmatprep.subr.bf16.mxu0 %v138
    %170 = vmatpush1.bf16.msra.mxu0 %v137
    %171 = vmatprep.subr.bf16.mxu0 %v140
    %172 = vmatpush1.bf16.msra.mxu0 %v139
    %173 = vmatprep.subr.bf16.mxu0 %v142
    %174 = vmatpush1.bf16.msra.mxu0 %v141
    %175 = vmatprep.subr.bf16.mxu0 %v144
    %176 = vmatpush1.bf16.msra.mxu0 %v143
    %177 = vmatprep.subr.bf16.mxu0 %v146
    %178 = vmatpush1.bf16.msra.mxu0 %v145
    %179 = vmatprep.subr.bf16.mxu0 %v148
    %180 = vmatpush1.bf16.msra.mxu0 %v147
    %181 = vmatprep.subr.bf16.mxu0 %v150
    %182 = vmatpush1.bf16.msra.mxu0 %v149
    %183 = vmatprep.subr.bf16.mxu0 %v152
    %184 = vmatpush1.bf16.msra.mxu0 %v151
    %185 = vmatprep.subr.bf16.mxu0 0
    %186 = vmatpush1.bf16.msra.mxu0 0
    %187 = vmatprep.subr.bf16.mxu0 0
    %188 = vmatpush1.bf16.msra.mxu0 0
    %189 = vmatprep.subr.bf16.mxu0 0
    %190 = vmatpush1.bf16.msra.mxu0 0
    %191 = vmatprep.subr.bf16.mxu0 0
    %192 = vmatpush1.bf16.msra.mxu0 0
    %193 = vmatprep.subr.bf16.mxu0 0
    %194 = vmatpush1.bf16.msra.mxu0 0
    %195 = vmatprep.subr.bf16.mxu0 0
    %196 = vmatpush1.bf16.msra.mxu0 0
    %197 = vmatprep.subr.bf16.mxu0 0
    %198 = vmatpush1.bf16.msra.mxu0 0
    %199 = vmatprep.subr.bf16.mxu0 0
    %200 = vmatpush1.bf16.msra.mxu0 0
    %201 = vmatprep.mubr.bf16.mxu0 0
    %202 = vmatmul.mubr.bf16.gmra.mrb[0].mxu0 %v72
    %v203 = vpop.f32.mrb[0].mxu0
    %v204 = vadd.f32 0.0, %v203
    %v205 = vpop.f32.mrb[0].mxu0
    %v206 = vadd.f32 0.0, %v205
    %v207 = vpop.f32.mrb[0].mxu0
    %v208 = vpop.f32.mrb[0].mxu0
    %209 = vdwg.mxu0
    %v210 = vld [vmem:[#allocation7] sm:$0xff]
    %v211 = vld [vmem:[#allocation7 + $0x8] sm:$0xff]
    %v212 = vld [vmem:[#allocation7 + $0x10] sm:$0xff]
    %v213 = vld [vmem:[#allocation7 + $0x18] sm:$0xff]
    %v214 = vld [vmem:[#allocation7 + $0x20] sm:$0xff]
    %v215 = vld [vmem:[#allocation7 + $0x28] sm:$0xff]
    %v216 = vld [vmem:[#allocation7 + $0x30] sm:$0xff]
    %v217 = vld [vmem:[#allocation7 + $0x38] sm:$0xff]
    %v218 = vld [vmem:[#allocation7 + $0x40] sm:$0xff]
    %v219 = vld [vmem:[#allocation7 + $0x48] sm:$0xff]
    %v220 = vld [vmem:[#allocation7 + $0x50] sm:$0xff]
    %v221 = vld [vmem:[#allocation7 + $0x58] sm:$0xff]
    %v222 = vld [vmem:[#allocation7 + $0x60] sm:$0xff]
    %v223 = vld [vmem:[#allocation7 + $0x68] sm:$0xff]
    %v224 = vld [vmem:[#allocation7 + $0x70] sm:$0xff]
    %v225 = vld [vmem:[#allocation7 + $0x78] sm:$0xff]
    %v242 = vunpack.c.l.b16 %v210
    %v243 = vunpack.c.h.b16 %v210
    %v244 = vunpack.c.l.b16 %v211
    %v245 = vunpack.c.h.b16 %v211
    %v246 = vunpack.c.l.b16 %v212
    %v247 = vunpack.c.h.b16 %v212
    %v248 = vunpack.c.l.b16 %v213
    %v249 = vunpack.c.h.b16 %v213
    %v250 = vunpack.c.l.b16 %v214
    %v251 = vunpack.c.h.b16 %v214
    %v252 = vunpack.c.l.b16 %v215
    %v253 = vunpack.c.h.b16 %v215
    %v254 = vunpack.c.l.b16 %v216
    %v255 = vunpack.c.h.b16 %v216
    %v256 = vunpack.c.l.b16 %v217
    %v257 = vunpack.c.h.b16 %v217
    %v258 = vunpack.c.l.b16 %v218
    %v259 = vunpack.c.h.b16 %v218
    %v260 = vunpack.c.l.b16 %v219
    %v261 = vunpack.c.h.b16 %v219
    %v262 = vunpack.c.l.b16 %v220
    %v263 = vunpack.c.h.b16 %v220
    %v264 = vunpack.c.l.b16 %v221
    %v265 = vunpack.c.h.b16 %v221
    %v266 = vunpack.c.l.b16 %v222
    %v267 = vunpack.c.h.b16 %v222
    %v268 = vunpack.c.l.b16 %v223
    %v269 = vunpack.c.h.b16 %v223
    %v270 = vunpack.c.l.b16 %v224
    %v271 = vunpack.c.h.b16 %v224
    %v272 = vunpack.c.l.b16 %v225
    %v273 = vunpack.c.h.b16 %v225
    %v274 = vpack.c.b16 %v244, %v242
    %v275 = vpack.c.b16 %v245, %v243
    %v276 = vpack.c.b16 %v248, %v246
    %v277 = vpack.c.b16 %v249, %v247
    %v278 = vpack.c.b16 %v252, %v250
    %v279 = vpack.c.b16 %v253, %v251
    %v280 = vpack.c.b16 %v256, %v254
    %v281 = vpack.c.b16 %v257, %v255
    %v282 = vpack.c.b16 %v260, %v258
    %v283 = vpack.c.b16 %v261, %v259
    %v284 = vpack.c.b16 %v264, %v262
    %v285 = vpack.c.b16 %v265, %v263
    %v286 = vpack.c.b16 %v268, %v266
    %v287 = vpack.c.b16 %v269, %v267
    %v288 = vpack.c.b16 %v272, %v270
    %v289 = vpack.c.b16 %v273, %v271
    %306 = vmatprep.subr.bf16.mxu0 %v275
    %307 = vmatpush1.bf16.msra.mxu0 %v274
    %308 = vmatprep.subr.bf16.mxu0 %v277
    %309 = vmatpush1.bf16.msra.mxu0 %v276
    %310 = vmatprep.subr.bf16.mxu0 %v279
    %311 = vmatpush1.bf16.msra.mxu0 %v278
    %312 = vmatprep.subr.bf16.mxu0 %v281
    %313 = vmatpush1.bf16.msra.mxu0 %v280
    %314 = vmatprep.subr.bf16.mxu0 %v283
    %315 = vmatpush1.bf16.msra.mxu0 %v282
    %316 = vmatprep.subr.bf16.mxu0 %v285
    %317 = vmatpush1.bf16.msra.mxu0 %v284
    %318 = vmatprep.subr.bf16.mxu0 %v287
    %319 = vmatpush1.bf16.msra.mxu0 %v286
    %320 = vmatprep.subr.bf16.mxu0 %v289
    %321 = vmatpush1.bf16.msra.mxu0 %v288
    %322 = vmatprep.subr.bf16.mxu0 0
    %323 = vmatpush1.bf16.msra.mxu0 0
    %324 = vmatprep.subr.bf16.mxu0 0
    %325 = vmatpush1.bf16.msra.mxu0 0
    %326 = vmatprep.subr.bf16.mxu0 0
    %327 = vmatpush1.bf16.msra.mxu0 0
    %328 = vmatprep.subr.bf16.mxu0 0
    %329 = vmatpush1.bf16.msra.mxu0 0
    %330 = vmatprep.subr.bf16.mxu0 0
    %331 = vmatpush1.bf16.msra.mxu0 0
    %332 = vmatprep.subr.bf16.mxu0 0
    %333 = vmatpush1.bf16.msra.mxu0 0
    %334 = vmatprep.subr.bf16.mxu0 0
    %335 = vmatpush1.bf16.msra.mxu0 0
    %336 = vmatprep.subr.bf16.mxu0 0
    %337 = vmatpush1.bf16.msra.mxu0 0
    %338 = vmatprep.mubr.bf16.mxu0 0
    %339 = vmatmul.mubr.bf16.gmra.mrb[0].mxu0 %v72
    %v340 = vpop.f32.mrb[0].mxu0
    %v341 = vadd.f32 0.0, %v340
    %v342 = vpop.f32.mrb[0].mxu0
    %v343 = vadd.f32 0.0, %v342
    %v344 = vpop.f32.mrb[0].mxu0
    %v345 = vpop.f32.mrb[0].mxu0
    %346 = vdwg.mxu0
    %v347 = vmul.f32 %v204, 0.5
    %v348 = vmul.f32 %v206, 0.5
    %v349 = vmul.f32 %v204, 0.70710677
    %v350 = vmul.f32 %v206, 0.70710677
    %vm351 = vcmp.ge.f32.partialorder %v349, 0.0
    %vm352 = vcmp.ge.f32.partialorder %v350, 0.0
    %v353 = vsel %vm351, 1.0, -1.0
    %v354 = vsel %vm352, 1.0, -1.0
    %v355 = vand.u32 2147483647, %v349
    %v356 = vand.u32 2147483647, %v350
    %v357 = vmul.f32 %v355, 0.3275911
    %v358 = vmul.f32 %v356, 0.3275911
    %v359 = vadd.f32 %v357, 1.0
    %v360 = vadd.f32 %v358, 1.0
    %v361 = vrcp.pop %v359
    %v362 = vmul.f32 1.0, %v361
    %v363 = vrcp.pop %v360
    %v364 = vmul.f32 1.0, %v363
    %v365 = vmul.f32 %v362, 1.0614054
    %v366 = vmul.f32 %v364, 1.0614054
    %v367 = vadd.f32 %v365, -1.4531521
    %v368 = vadd.f32 %v366, -1.4531521
    %v369 = vmul.f32 %v362, %v367
    %v370 = vmul.f32 %v364, %v368
    %v371 = vadd.f32 %v369, 1.4214138
    %v372 = vadd.f32 %v370, 1.4214138
    %v373 = vmul.f32 %v362, %v371
    %v374 = vmul.f32 %v364, %v372
    %v375 = vadd.f32 %v373, -0.28449672
    %v376 = vadd.f32 %v374, -0.28449672
    %v377 = vmul.f32 %v362, %v375
    %v378 = vmul.f32 %v364, %v376
    %v379 = vadd.f32 %v377, 0.2548296
    %v380 = vadd.f32 %v378, 0.2548296
    %v381 = vmul.f32 %v362, %v379
    %v382 = vmul.f32 %v364, %v380
    %v383 = vsub.f32 0.0, %v355
    %v384 = vsub.f32 0.0, %v356
    %v385 = vmul.f32 %v383, %v355
    %v386 = vmul.f32 %v384, %v356
    %v387 = vmul.f32 %v385, 1.442695
    %v388 = vpow.pop %v387
    %v389 = vmul.f32 %v386, 1.442695
    %v390 = vpow.pop %v389
    %v391 = vmul.f32 %v381, %v388
    %v392 = vmul.f32 %v382, %v390
    %v393 = vsub.f32 1.0, %v391
    %v394 = vsub.f32 1.0, %v392
    %v395 = vmul.f32 %v353, %v393
    %v396 = vmul.f32 %v354, %v394
    %v397 = vadd.f32 %v395, 1.0
    %v398 = vadd.f32 %v396, 1.0
    %v399 = vmul.f32 %v347, %v397
    %v400 = vmul.f32 %v348, %v398
    %v401 = vmul.f32 %v399, %v341
    %v402 = vmul.f32 %v400, %v343
    %v403 = vpack.c.bf16 %v401, %v401
    %v404 = vpack.c.bf16 %v402, %v402
    %v405 = vld [vmem:[#allocation8] sm:$0xf]
    %v406 = vld [vmem:[#allocation8 + $0x4] sm:$0xf]
    %v407 = vld [vmem:[#allocation8 + $0x8] sm:$0xf]
    %v408 = vld [vmem:[#allocation8 + $0xc] sm:$0xf]
    %v409 = vld [vmem:[#allocation8 + $0x10] sm:$0xf]
    %v410 = vld [vmem:[#allocation8 + $0x14] sm:$0xf]
    %v411 = vld [vmem:[#allocation8 + $0x18] sm:$0xf]
    %v412 = vld [vmem:[#allocation8 + $0x1c] sm:$0xf]
    %v413 = vld [vmem:[#allocation8 + $0x20] sm:$0xf]
    %v414 = vld [vmem:[#allocation8 + $0x24] sm:$0xf]
    %v415 = vld [vmem:[#allocation8 + $0x28] sm:$0xf]
    %v416 = vld [vmem:[#allocation8 + $0x2c] sm:$0xf]
    %v417 = vld [vmem:[#allocation8 + $0x30] sm:$0xf]
    %v418 = vld [vmem:[#allocation8 + $0x34] sm:$0xf]
    %v419 = vld [vmem:[#allocation8 + $0x38] sm:$0xf]
    %v420 = vld [vmem:[#allocation8 + $0x3c] sm:$0xf]
    %v421 = vld [vmem:[#allocation8 + $0x40] sm:$0xf]
    %v422 = vld [vmem:[#allocation8 + $0x44] sm:$0xf]
    %v423 = vld [vmem:[#allocation8 + $0x48] sm:$0xf]
    %v424 = vld [vmem:[#allocation8 + $0x4c] sm:$0xf]
    %v425 = vld [vmem:[#allocation8 + $0x50] sm:$0xf]
    %v426 = vld [vmem:[#allocation8 + $0x54] sm:$0xf]
    %v427 = vld [vmem:[#allocation8 + $0x58] sm:$0xf]
    %v428 = vld [vmem:[#allocation8 + $0x5c] sm:$0xf]
    %v429 = vld [vmem:[#allocation8 + $0x60] sm:$0xf]
    %v430 = vld [vmem:[#allocation8 + $0x64] sm:$0xf]
    %v431 = vld [vmem:[#allocation8 + $0x68] sm:$0xf]
    %v432 = vld [vmem:[#allocation8 + $0x6c] sm:$0xf]
    %v433 = vld [vmem:[#allocation8 + $0x70] sm:$0xf]
    %v434 = vld [vmem:[#allocation8 + $0x74] sm:$0xf]
    %v435 = vld [vmem:[#allocation8 + $0x78] sm:$0xf]
    %v436 = vld [vmem:[#allocation8 + $0x7c] sm:$0xf]
    %v469 = vunpack.c.l.b16 %v405
    %v470 = vunpack.c.l.b16 %v406
    %v471 = vunpack.c.l.b16 %v407
    %v472 = vunpack.c.l.b16 %v408
    %v473 = vunpack.c.l.b16 %v409
    %v474 = vunpack.c.l.b16 %v410
    %v475 = vunpack.c.l.b16 %v411
    %v476 = vunpack.c.l.b16 %v412
    %v477 = vunpack.c.l.b16 %v413
    %v478 = vunpack.c.l.b16 %v414
    %v479 = vunpack.c.l.b16 %v415
    %v480 = vunpack.c.l.b16 %v416
    %v481 = vunpack.c.l.b16 %v417
    %v482 = vunpack.c.l.b16 %v418
    %v483 = vunpack.c.l.b16 %v419
    %v484 = vunpack.c.l.b16 %v420
    %v485 = vunpack.c.l.b16 %v421
    %v486 = vunpack.c.l.b16 %v422
    %v487 = vunpack.c.l.b16 %v423
    %v488 = vunpack.c.l.b16 %v424
    %v489 = vunpack.c.l.b16 %v425
    %v490 = vunpack.c.l.b16 %v426
    %v491 = vunpack.c.l.b16 %v427
    %v492 = vunpack.c.l.b16 %v428
    %v493 = vunpack.c.l.b16 %v429
    %v494 = vunpack.c.l.b16 %v430
    %v495 = vunpack.c.l.b16 %v431
    %v496 = vunpack.c.l.b16 %v432
    %v497 = vunpack.c.l.b16 %v433
    %v498 = vunpack.c.l.b16 %v434
    %v499 = vunpack.c.l.b16 %v435
    %v500 = vunpack.c.l.b16 %v436
    %v501 = vpack.c.b16 %v470, %v469
    %v502 = vpack.c.b16 %v472, %v471
    %v503 = vpack.c.b16 %v474, %v473
    %v504 = vpack.c.b16 %v476, %v475
    %v505 = vpack.c.b16 %v478, %v477
    %v506 = vpack.c.b16 %v480, %v479
    %v507 = vpack.c.b16 %v482, %v481
    %v508 = vpack.c.b16 %v484, %v483
    %v509 = vpack.c.b16 %v486, %v485
    %v510 = vpack.c.b16 %v488, %v487
    %v511 = vpack.c.b16 %v490, %v489
    %v512 = vpack.c.b16 %v492, %v491
    %v513 = vpack.c.b16 %v494, %v493
    %v514 = vpack.c.b16 %v496, %v495
    %v515 = vpack.c.b16 %v498, %v497
    %v516 = vpack.c.b16 %v500, %v499
    %533 = vmatprep.subr.bf16.mxu0 0
    %534 = vmatpush1.bf16.msra.mxu0 %v501
    %535 = vmatprep.subr.bf16.mxu0 0
    %536 = vmatpush1.bf16.msra.mxu0 %v502
    %537 = vmatprep.subr.bf16.mxu0 0
    %538 = vmatpush1.bf16.msra.mxu0 %v503
    %539 = vmatprep.subr.bf16.mxu0 0
    %540 = vmatpush1.bf16.msra.mxu0 %v504
    %541 = vmatprep.subr.bf16.mxu0 0
    %542 = vmatpush1.bf16.msra.mxu0 %v505
    %543 = vmatprep.subr.bf16.mxu0 0
    %544 = vmatpush1.bf16.msra.mxu0 %v506
    %545 = vmatprep.subr.bf16.mxu0 0
    %546 = vmatpush1.bf16.msra.mxu0 %v507
    %547 = vmatprep.subr.bf16.mxu0 0
    %548 = vmatpush1.bf16.msra.mxu0 %v508
    %549 = vmatprep.subr.bf16.mxu0 0
    %550 = vmatpush1.bf16.msra.mxu0 %v509
    %551 = vmatprep.subr.bf16.mxu0 0
    %552 = vmatpush1.bf16.msra.mxu0 %v510
    %553 = vmatprep.subr.bf16.mxu0 0
    %554 = vmatpush1.bf16.msra.mxu0 %v511
    %555 = vmatprep.subr.bf16.mxu0 0
    %556 = vmatpush1.bf16.msra.mxu0 %v512
    %557 = vmatprep.subr.bf16.mxu0 0
    %558 = vmatpush1.bf16.msra.mxu0 %v513
    %559 = vmatprep.subr.bf16.mxu0 0
    %560 = vmatpush1.bf16.msra.mxu0 %v514
    %561 = vmatprep.subr.bf16.mxu0 0
    %562 = vmatpush1.bf16.msra.mxu0 %v515
    %563 = vmatprep.subr.bf16.mxu0 0
    %564 = vmatpush1.bf16.msra.mxu0 %v516
    %565 = vmatprep.mubr.bf16.mxu0 %v404
    %566 = vmatmul.mubr.bf16.gmra.mrb[0].mxu0 %v403
    %v567 = vpop.f32.mrb[0].mxu0
    %v568 = vadd.f32 0.0, %v567
    %v569 = vpop.f32.mrb[0].mxu0
    %v570 = vpop.f32.mrb[0].mxu0
    %v571 = vpop.f32.mrb[0].mxu0
    %572 = vdwg.mxu0
    %573 = vst [vmem:[#allocation10] sm:$0xff] %v568
    // Predicated region
    $region34: #{tpu_custom_call.1} parent=1 // pred_check
      _
    $region35: #{tpu_custom_call.1} parent=1 // pred_check_branch
      %575 = sbr.rel (0) target = $region37
    $region36: #{tpu_custom_call.1} parent=1 // pred_region
      %s577 = ssub.s32 128, 128
      %578 = vsyncadd [#allocation4], %s577
      %s580 = sshll.u32 [#allocation10], 4
      %s581 = int_to_ptr.vmem [resolvable:$true] %s580
      %583 = dma.vmem_to_hbm [thread:$0]  %s581, 128, %s4, [#allocation4]
    $region37: #{tpu_custom_call.1} parent=1 // pred_fallthru
      _
    // Predicated region
    $region38: #{tpu_custom_call.1} parent=1 // pred_check
      _
    $region39: #{tpu_custom_call.1} parent=1 // pred_check_branch
      %585 = sbr.rel (0) target = $region41
    $region40: #{tpu_custom_call.1} parent=1 // pred_region
      %586 = dma.done [#allocation4], 128
    $region41: #{tpu_custom_call.1} parent=1 // pred_fallthru
      _
    %587 = vsyncpa [#allocation3], 1
    %588 = vsyncpa [#allocation6], 1
    %589 = vsyncpa [#allocation9], 1
    %590 = vsyncpa [#allocation4], 1

</llo_original>
